<compile_context>
chip_gen: v7x
topology: tpu7x:2x2x1
jax: 0.10.0
libtpu: 0.0.40
codegen_flags: <defaults>
</compile_context>

<pallas_src>
import functools

import jax
import jax.numpy as jnp
from jax.experimental import pallas as pl
from jax.experimental.pallas import tpu as pltpu


def _bnhead_kernel(bias_ref, *refs, min_depth, n_levels):
    # bias_ref: (B,) f32 in SMEM (conv bias + folded cls contribution, per batch)
    # refs: x_0..x_{L-1} (1, C_l, tHW), w_0..w_{L-1} (1, C_l) f32, o_ref (1, 1, tHW)
    x_refs = refs[:n_levels]
    w_refs = refs[n_levels:2 * n_levels]
    o_ref = refs[2 * n_levels]

    acc = None
    for l in range(n_levels):
        x = x_refs[l][0]                        # (C_l, tHW), backbone's native dtype
        w = w_refs[l][...]                      # (1, C_l), f32, VMEM-resident
        if w.dtype != x.dtype:
            # Tiny cast in VMEM: enables the fast bf16 MXU path when features
            # are streamed as bf16, with f32 accumulation.
            w = w.astype(x.dtype)
        d = jnp.dot(w, x, preferred_element_type=jnp.float32)   # (1, tHW)
        acc = d if acc is None else acc + d

    b = pl.program_id(1)                        # grid = (spatial, batch)
    y = acc + bias_ref[b]                       # conv bias + (w_cls . cls_token)
    y = jnp.maximum(y, 0.0) + min_depth         # relu(conv(x)) + min_depth
    o_ref[0] = y.astype(o_ref.dtype)


def _vmem_budgets():
    """Per-generation (feature-tile budget, vmem_limit cap) in bytes."""
    try:
        cap = pltpu.get_tpu_info().vmem_capacity_bytes
    except Exception:  # e.g. interpret mode / unknown chip
        cap = 64 << 20
    if cap >= (96 << 20):        # v5e / v6e: 128 MiB physical VMEM
        return 56 << 20, 96 << 20
    return 24 << 20, 40 << 20    # v7x: 64 MiB physical VMEM


def _pick_tile_hw(HW, total_C, itemsize, budget_bytes, buffer_count):
    """Largest 128-multiple spatial tile whose N-buffered feature tiles fit budget."""
    hw_pad = ((HW + 127) // 128) * 128          # lane-aligned upper bound on the tile
    denom = max(buffer_count * total_C * itemsize, 1)
    t = (budget_bytes // denom) // 128 * 128
    return int(max(128, min(t, hw_pad)))


def bnhead_conv_depth(xs, ws, bias, *, min_depth, tile_hw=None, buffer_count=2):
    """Fused multi-level 1x1 conv + ReLU + min_depth.

    xs:   list of per-level patch features, each (B, C_l, HW), any float dtype
    ws:   list of per-level conv weights,   each (1, C_l), f32
    bias: (B,) f32 per-batch bias = conv_b + sum_l w_cls_l . cls_l
    buffer_count: pipeline depth for the feature tiles (2 = default double
                  buffering; 3 hides DMA turnaround on v7x if xprof shows gaps).
    Returns (B, 1, HW) f32.
    """
    n_levels = len(xs)
    B, _, HW = xs[0].shape
    total_C = sum(int(x.shape[1]) for x in xs)
    itemsize = max(jnp.dtype(x.dtype).itemsize for x in xs)

    budget_bytes, limit_cap = _vmem_budgets()
    tHW = tile_hw if tile_hw is not None else _pick_tile_hw(
        HW, total_C, itemsize, budget_bytes, buffer_count)

    # VMEM footprint: N-buffered feature tiles + (double-buffered) weights + output.
    feat_bytes = buffer_count * sum(
        int(x.shape[1]) * tHW * jnp.dtype(x.dtype).itemsize for x in xs)
    w_bytes = 2 * sum(int(w.shape[1]) * jnp.dtype(w.dtype).itemsize for w in ws)
    out_bytes = 2 * tHW * 4
    footprint = feat_bytes + w_bytes + out_bytes
    vmem_limit = int(min(limit_cap, footprint + (16 << 20)))   # explicit headroom

    pipeline_mode = pl.Buffered(buffer_count) if buffer_count != 2 else None

    in_specs = [pl.BlockSpec(memory_space=pltpu.MemorySpace.SMEM)]  # bias (whole array)
    for x in xs:
        C_l = int(x.shape[1])
        if pipeline_mode is None:
            in_specs.append(pl.BlockSpec((1, C_l, tHW), lambda t, b: (b, 0, t)))
        else:
            in_specs.append(pl.BlockSpec((1, C_l, tHW), lambda t, b: (b, 0, t),
                                         pipeline_mode=pipeline_mode))
    for w in ws:
        C_l = int(w.shape[1])
        # Constant index_map -> weight tile DMA'd once, VMEM-resident across the grid.
        in_specs.append(pl.BlockSpec((1, C_l), lambda t, b: (0, 0)))

    n_spatial = pl.cdiv(HW, tHW)

    # Advisory cost so XLA overlaps surrounding ops with this bandwidth-bound call.
    bytes_accessed = int(
        sum(int(x.size) * jnp.dtype(x.dtype).itemsize for x in xs)
        + sum(int(w.size) * jnp.dtype(w.dtype).itemsize for w in ws)
        + B * HW * 4)
    cost = pl.CostEstimate(flops=int(2 * total_C * B * HW),
                           transcendentals=0,
                           bytes_accessed=bytes_accessed)

    kernel = functools.partial(_bnhead_kernel, min_depth=min_depth,
                               n_levels=n_levels)
    return pl.pallas_call(
        kernel,
        out_shape=jax.ShapeDtypeStruct((B, 1, HW), jnp.float32),
        grid_spec=pltpu.PrefetchScalarGridSpec(
            num_scalar_prefetch=0,
            # Spatial axis first (most steps) so v7x's 2 TensorCores shard it.
            grid=(n_spatial, B),
            in_specs=in_specs,
            out_specs=pl.BlockSpec((1, 1, tHW), lambda t, b: (b, 0, t)),
        ),
        compiler_params=pltpu.CompilerParams(
            dimension_semantics=("parallel", "parallel"),
            vmem_limit_bytes=vmem_limit,
        ),
        cost_estimate=cost,
    )(bias, *xs, *ws)


def bnhead_forward(inputs, conv_w, conv_b, *, min_depth=1e-3, tile_hw=None,
                   buffer_count=2):
    """BNHead.forward for inputs = list of (patch_tokens, cls_token).

    patch_tokens: (B, C_l, H, W) in the backbone's native dtype (f32 or bf16 —
            streamed as-is, never cast in the wrapper); cls_token: (B, C_l).
    conv_w: (1, channels) f32 — flattened Conv2d(channels, 1, k=1) weight, with
            channels laid out as [x_0, cls_0, x_1, cls_1, ...] (the module's
            per-level (patch, cls) concat followed by the level concat).
    conv_b: (1, 1) — conv bias.
    Returns (B, 1, H, W) f32.
    """
    B, _, H, W = inputs[0][0].shape
    for x, cls_tok in inputs:
        # 'resize_concat' with upsample=1: resize-to-same-size is the identity.
        assert x.shape[0] == B and x.shape[2:] == (H, W), (
            "resize_concat with mismatched per-level spatial sizes is not supported")
        assert cls_tok.shape == (B, x.shape[1])
    # TODO(synk): bilinear resize for mismatched per-level spatial sizes / upsample>1
    # and the classify=True (bins) path are not implemented.

    xs, ws = [], []
    cls_bias = jnp.zeros((B,), jnp.float32)
    off = 0
    for x, cls_tok in inputs:
        C_l = int(x.shape[1])
        w_patch = conv_w[:, off:off + C_l].astype(jnp.float32)
        off += C_l
        w_cls = conv_w[:, off:off + C_l]
        off += C_l
        # Fold the (spatially constant) cls-token contribution into a per-batch bias.
        cls_bias = cls_bias + jnp.einsum(
            'bc,c->b', cls_tok.astype(jnp.float32), w_cls[0].astype(jnp.float32))
        # No dtype cast here: casting f32->bf16 in the wrapper would cost a full
        # extra HBM read+write pass; the kernel handles mixed dtypes internally.
        xs.append(x.reshape(B, C_l, H * W))
        ws.append(w_patch)
    assert off == conv_w.shape[1], "channels mismatch with conv_depth weight"

    bias = cls_bias + conv_b.reshape(()).astype(jnp.float32)   # (B,)
    out = bnhead_conv_depth(xs, ws, bias, min_depth=min_depth,
                            tile_hw=tile_hw, buffer_count=buffer_count)
    return out.reshape(B, 1, H, W)


if __name__ == "__main__":
    min_depth = 1e-3

    def make_case(B, C, H, W, n_levels, key):
        keys = jax.random.split(key, 2 * n_levels + 2)
        inputs = []
        for i in range(n_levels):
            x = jax.random.normal(keys[2 * i], (B, C, H, W), jnp.float32)
            cls_tok = jax.random.normal(keys[2 * i + 1], (B, C), jnp.float32)
            inputs.append((x, cls_tok))
        channels = 2 * C * n_levels     # cls concat doubles C; n_levels concatenated
        conv_w = 0.1 * jax.random.normal(keys[-2], (1, channels), jnp.float32)
        conv_b = 0.1 * jax.random.normal(keys[-1], (1, 1), jnp.float32)
        return inputs, conv_w, conv_b

    def reference(inputs, conv_w, conv_b):
        # Pure-JAX reference of the full module forward (explicit concat path).
        feat = jnp.concatenate(
            [jnp.concatenate(
                [x.astype(jnp.float32),
                 jnp.broadcast_to(c.astype(jnp.float32)[:, :, None, None], x.shape)],
                axis=1) for x, c in inputs], axis=1)
        return (jnp.maximum(
            jnp.einsum('bchw,c->bhw', feat, conv_w[0]) + conv_b[0, 0], 0.0
        )[:, None, :, :] + min_depth)

    # Case 1: f32 features, 128-aligned spatial size (16x16 -> HW=256).
    inputs, conv_w, conv_b = make_case(2, 8, 16, 16, 4, jax.random.PRNGKey(0))
    out = jax.block_until_ready(
        bnhead_forward(inputs, conv_w, conv_b, min_depth=min_depth))
    ref = reference(inputs, conv_w, conv_b)
    assert out.shape == (2, 1, 16, 16)
    assert jnp.allclose(out, ref, atol=1e-5, rtol=1e-5)

    # Case 2: backbone natively emits bf16 — features streamed as-is (no wrapper
    # cast), weights cast to bf16 in-kernel, f32 MXU accumulation.
    inputs_bf16 = [(x.astype(jnp.bfloat16), c.astype(jnp.bfloat16))
                   for x, c in inputs]
    out_bf16 = jax.block_until_ready(
        bnhead_forward(inputs_bf16, conv_w, conv_b, min_depth=min_depth))
    ref_bf16 = reference(inputs_bf16, conv_w, conv_b)
    assert jnp.allclose(out_bf16, ref_bf16, atol=3e-2, rtol=3e-2)

    # Case 3: non-128-aligned spatial size (13x13 -> HW=169) with a forced 128
    # tile: exercises lane-dense blocks + masked partial final block (the
    # realistic DINOv2 37x37 path) without any wrapper-side padding.
    inputs_odd, conv_w_odd, conv_b_odd = make_case(2, 8, 13, 13, 4,
                                                   jax.random.PRNGKey(1))
    out_odd = jax.block_until_ready(
        bnhead_forward(inputs_odd, conv_w_odd, conv_b_odd,
                       min_depth=min_depth, tile_hw=128))
    ref_odd = reference(inputs_odd, conv_w_odd, conv_b_odd)
    assert out_odd.shape == (2, 1, 13, 13)
    assert jnp.allclose(out_odd, ref_odd, atol=1e-5, rtol=1e-5)

    print("KERNEL_OK")
</pallas_src>

<mosaic_0001>
module attributes {stable_mosaic.version = 11 : i64} {
  func.func @_bnhead_kernel(%arg0: i32, %arg1: i32, %arg2: memref<2xf32, #tpu.memory_space<smem>>, %arg3: memref<1x8x256xf32, #tpu.memory_space<vmem>>, %arg4: memref<1x8x256xf32, #tpu.memory_space<vmem>>, %arg5: memref<1x8x256xf32, #tpu.memory_space<vmem>>, %arg6: memref<1x8x256xf32, #tpu.memory_space<vmem>>, %arg7: memref<1x8xf32, #tpu.memory_space<vmem>>, %arg8: memref<1x8xf32, #tpu.memory_space<vmem>>, %arg9: memref<1x8xf32, #tpu.memory_space<vmem>>, %arg10: memref<1x8xf32, #tpu.memory_space<vmem>>, %arg11: memref<1x1x256xf32, #tpu.memory_space<vmem>>) attributes {dimension_semantics = [#tpu.dimension_semantics<parallel>, #tpu.dimension_semantics<parallel>], iteration_bounds = array<i64: 1, 2>, scalar_prefetch = 0 : i64, scratch_operands = 0 : i64, tpu.core_type = #tpu.core_type<tc>, window_params = [{transform_indices = @transform_0, window_bounds = array<i64: 2>}, {transform_indices = @transform_1, window_bounds = array<i64: 1, 8, 256>}, {transform_indices = @transform_2, window_bounds = array<i64: 1, 8, 256>}, {transform_indices = @transform_3, window_bounds = array<i64: 1, 8, 256>}, {transform_indices = @transform_4, window_bounds = array<i64: 1, 8, 256>}, {pipeline_mode = #tpu.pipeline_mode<synchronous>, transform_indices = @transform_5, window_bounds = array<i64: 1, 8>}, {pipeline_mode = #tpu.pipeline_mode<synchronous>, transform_indices = @transform_6, window_bounds = array<i64: 1, 8>}, {pipeline_mode = #tpu.pipeline_mode<synchronous>, transform_indices = @transform_7, window_bounds = array<i64: 1, 8>}, {pipeline_mode = #tpu.pipeline_mode<synchronous>, transform_indices = @transform_8, window_bounds = array<i64: 1, 8>}, {transform_indices = @transform_9, window_bounds = array<i64: 1, 1, 256>}]} {
    %c0 = arith.constant 0 : index
    %c0_0 = arith.constant 0 : index
    %c0_1 = arith.constant 0 : index
    %0 = vector.load %arg3[%c0, %c0_0, %c0_1] : memref<1x8x256xf32, #tpu.memory_space<vmem>>, vector<1x8x256xf32>
    %1 = vector.shape_cast %0 : vector<1x8x256xf32> to vector<8x256xf32>
    %c0_2 = arith.constant 0 : index
    %c0_3 = arith.constant 0 : index
    %2 = vector.load %arg7[%c0_2, %c0_3] : memref<1x8xf32, #tpu.memory_space<vmem>>, vector<1x8xf32>
    %cst = arith.constant dense<0.000000e+00> : vector<1x256xf32>
    %3 = tpu.matmul %2, %1, %cst {dimension_numbers = #tpu.dot_dimension_numbers<[1], [0], [0], [1], [0, 0, 1, 1], [], []>} : vector<1x8xf32>, vector<8x256xf32>, vector<1x256xf32> -> vector<1x256xf32>
    %c0_4 = arith.constant 0 : index
    %c0_5 = arith.constant 0 : index
    %c0_6 = arith.constant 0 : index
    %4 = vector.load %arg4[%c0_4, %c0_5, %c0_6] : memref<1x8x256xf32, #tpu.memory_space<vmem>>, vector<1x8x256xf32>
    %5 = vector.shape_cast %4 : vector<1x8x256xf32> to vector<8x256xf32>
    %c0_7 = arith.constant 0 : index
    %c0_8 = arith.constant 0 : index
    %6 = vector.load %arg8[%c0_7, %c0_8] : memref<1x8xf32, #tpu.memory_space<vmem>>, vector<1x8xf32>
    %cst_9 = arith.constant dense<0.000000e+00> : vector<1x256xf32>
    %7 = tpu.matmul %6, %5, %cst_9 {dimension_numbers = #tpu.dot_dimension_numbers<[1], [0], [0], [1], [0, 0, 1, 1], [], []>} : vector<1x8xf32>, vector<8x256xf32>, vector<1x256xf32> -> vector<1x256xf32>
    %8 = arith.addf %3, %7 : vector<1x256xf32>
    %c0_10 = arith.constant 0 : index
    %c0_11 = arith.constant 0 : index
    %c0_12 = arith.constant 0 : index
    %9 = vector.load %arg5[%c0_10, %c0_11, %c0_12] : memref<1x8x256xf32, #tpu.memory_space<vmem>>, vector<1x8x256xf32>
    %10 = vector.shape_cast %9 : vector<1x8x256xf32> to vector<8x256xf32>
    %c0_13 = arith.constant 0 : index
    %c0_14 = arith.constant 0 : index
    %11 = vector.load %arg9[%c0_13, %c0_14] : memref<1x8xf32, #tpu.memory_space<vmem>>, vector<1x8xf32>
    %cst_15 = arith.constant dense<0.000000e+00> : vector<1x256xf32>
    %12 = tpu.matmul %11, %10, %cst_15 {dimension_numbers = #tpu.dot_dimension_numbers<[1], [0], [0], [1], [0, 0, 1, 1], [], []>} : vector<1x8xf32>, vector<8x256xf32>, vector<1x256xf32> -> vector<1x256xf32>
    %13 = arith.addf %8, %12 : vector<1x256xf32>
    %c0_16 = arith.constant 0 : index
    %c0_17 = arith.constant 0 : index
    %c0_18 = arith.constant 0 : index
    %14 = vector.load %arg6[%c0_16, %c0_17, %c0_18] : memref<1x8x256xf32, #tpu.memory_space<vmem>>, vector<1x8x256xf32>
    %15 = vector.shape_cast %14 : vector<1x8x256xf32> to vector<8x256xf32>
    %c0_19 = arith.constant 0 : index
    %c0_20 = arith.constant 0 : index
    %16 = vector.load %arg10[%c0_19, %c0_20] : memref<1x8xf32, #tpu.memory_space<vmem>>, vector<1x8xf32>
    %cst_21 = arith.constant dense<0.000000e+00> : vector<1x256xf32>
    %17 = tpu.matmul %16, %15, %cst_21 {dimension_numbers = #tpu.dot_dimension_numbers<[1], [0], [0], [1], [0, 0, 1, 1], [], []>} : vector<1x8xf32>, vector<8x256xf32>, vector<1x256xf32> -> vector<1x256xf32>
    %18 = arith.addf %13, %17 : vector<1x256xf32>
    %19 = arith.index_cast %arg1 : i32 to index
    %20 = memref.load %arg2[%19] : memref<2xf32, #tpu.memory_space<smem>>
    %21 = vector.broadcast %20 : f32 to vector<1x256xf32>
    %22 = arith.addf %18, %21 : vector<1x256xf32>
    %cst_22 = arith.constant 0.000000e+00 : f32
    %23 = vector.broadcast %cst_22 : f32 to vector<1x256xf32>
    %24 = arith.maximumf %22, %23 : vector<1x256xf32>
    %cst_23 = arith.constant 1.000000e-03 : f32
    %25 = vector.broadcast %cst_23 : f32 to vector<1x256xf32>
    %26 = arith.addf %24, %25 : vector<1x256xf32>
    %c0_24 = arith.constant 0 : index
    %c0_25 = arith.constant 0 : index
    %c0_26 = arith.constant 0 : index
    %27 = vector.load %arg11[%c0_24, %c0_25, %c0_26] : memref<1x1x256xf32, #tpu.memory_space<vmem>>, vector<1x1x256xf32>
    %28 = vector.shape_cast %27 : vector<1x1x256xf32> to vector<1x256xf32>
    %29 = vector.shape_cast %26 : vector<1x256xf32> to vector<1x1x256xf32>
    tpu.vector_store %arg11[%c0_24, %c0_25, %c0_26], %29 {strides = array<i32>} : memref<1x1x256xf32, #tpu.memory_space<vmem>>, vector<1x1x256xf32>,
    return
  }
  func.func @transform_0(%arg0: i32, %arg1: i32) -> i32 {
    %c0_i32 = arith.constant 0 : i32
    %c0_i32_0 = arith.constant 0 : i32
    return %c0_i32 : i32
  }
  func.func @transform_1(%arg0: i32, %arg1: i32) -> (i32, i32, i32) {
    %c0_i32 = arith.constant 0 : i32
    %c0_i32_0 = arith.constant 0 : i32
    return %arg1, %c0_i32, %arg0 : i32, i32, i32
  }
  func.func @transform_2(%arg0: i32, %arg1: i32) -> (i32, i32, i32) {
    %c0_i32 = arith.constant 0 : i32
    %c0_i32_0 = arith.constant 0 : i32
    return %arg1, %c0_i32, %arg0 : i32, i32, i32
  }
  func.func @transform_3(%arg0: i32, %arg1: i32) -> (i32, i32, i32) {
    %c0_i32 = arith.constant 0 : i32
    %c0_i32_0 = arith.constant 0 : i32
    return %arg1, %c0_i32, %arg0 : i32, i32, i32
  }
  func.func @transform_4(%arg0: i32, %arg1: i32) -> (i32, i32, i32) {
    %c0_i32 = arith.constant 0 : i32
    %c0_i32_0 = arith.constant 0 : i32
    return %arg1, %c0_i32, %arg0 : i32, i32, i32
  }
  func.func @transform_5(%arg0: i32, %arg1: i32) -> (i32, i32) {
    %c0_i32 = arith.constant 0 : i32
    %c0_i32_0 = arith.constant 0 : i32
    %c0_i32_1 = arith.constant 0 : i32
    return %c0_i32, %c0_i32_0 : i32, i32
  }
  func.func @transform_6(%arg0: i32, %arg1: i32) -> (i32, i32) {
    %c0_i32 = arith.constant 0 : i32
    %c0_i32_0 = arith.constant 0 : i32
    %c0_i32_1 = arith.constant 0 : i32
    return %c0_i32, %c0_i32_0 : i32, i32
  }
  func.func @transform_7(%arg0: i32, %arg1: i32) -> (i32, i32) {
    %c0_i32 = arith.constant 0 : i32
    %c0_i32_0 = arith.constant 0 : i32
    %c0_i32_1 = arith.constant 0 : i32
    return %c0_i32, %c0_i32_0 : i32, i32
  }
  func.func @transform_8(%arg0: i32, %arg1: i32) -> (i32, i32) {
    %c0_i32 = arith.constant 0 : i32
    %c0_i32_0 = arith.constant 0 : i32
    %c0_i32_1 = arith.constant 0 : i32
    return %c0_i32, %c0_i32_0 : i32, i32
  }
  func.func @transform_9(%arg0: i32, %arg1: i32) -> (i32, i32, i32) {
    %c0_i32 = arith.constant 0 : i32
    %c0_i32_0 = arith.constant 0 : i32
    return %arg1, %c0_i32, %arg0 : i32, i32, i32
  }
}

</mosaic_0001>

<llo_original>
// kernel: tpu_custom_call.1
$region0: #{tpu_custom_call.1}
  #allocation0 [shape = 'u32[]', space=smem, size = 0x4, offset = 0x4, fixed_abs, tag = 'smem constant byte address 0x4 - core index']
  #allocation1 [shape = 'u32[144,128]{1,0:T(1,128)}', space=vmem, size = 0x12000, scoped, tag = 'internal scratch']
  %s0 = inlined_call_operand.hbm [shape: f32[2], index: 0, kind: input, shape index: {}]
  %s1 = inlined_call_operand.hbm [shape: f32[2,8,256], index: 1, kind: input, shape index: {}]
  %s2 = inlined_call_operand.hbm [shape: f32[2,8,256], index: 2, kind: input, shape index: {}]
  %s3 = inlined_call_operand.hbm [shape: f32[2,8,256], index: 3, kind: input, shape index: {}]
  %s4 = inlined_call_operand.hbm [shape: f32[2,8,256], index: 4, kind: input, shape index: {}]
  %s5 = inlined_call_operand.vmem [shape: f32[1,8], index: 5, kind: input, shape index: {}]
  %s6 = inlined_call_operand.vmem [shape: f32[1,8], index: 6, kind: input, shape index: {}]
  %s7 = inlined_call_operand.vmem [shape: f32[1,8], index: 7, kind: input, shape index: {}]
  %s8 = inlined_call_operand.vmem [shape: f32[1,8], index: 8, kind: input, shape index: {}]
  %s9 = inlined_call_operand.hbm [shape: f32[2,1,256], index: 9, kind: output, shape index: {}]
  %s10 = sld [smem:[#allocation0]]
  $region89: #{tpu_custom_call.1} parent=0
    _
  %s12 = ssub.s32 1, %s10
  %s13 = scalar_select 0, %s12, %s10
  $region1: #{tpu_custom_call.1} parent=0
    #allocation2 [shape = 'u8[512]{0}', space=smem, size = 0x200, scoped, tag = 'input window, operand 0, single buffered']
    #allocation3 [shape = 's32[2]{0}', space=sflag, size = 0x8, scoped, tag = 'scoped memory for tpu_custom_call.1']
    #allocation4 [shape = 's32[2]{0}', space=sflag, size = 0x8, scoped, tag = 'scoped memory for tpu_custom_call.1']
    #allocation5 [shape = 's32[2]{0}', space=sflag, size = 0x8, scoped, tag = 'scoped memory for tpu_custom_call.1']
    #allocation6 [shape = 'u8[16384]{0}', space=vmem, size = 0x4000, scoped, tag = 'input window, operand 1']
    #allocation7 [shape = 'u8[16384]{0}', space=vmem, size = 0x4000, scoped, tag = 'input window, operand 2']
    #allocation8 [shape = 's32[2]{0}', space=sflag, size = 0x8, scoped, tag = 'scoped memory for tpu_custom_call.1']
    #allocation9 [shape = 'u8[16384]{0}', space=vmem, size = 0x4000, scoped, tag = 'input window, operand 3']
    #allocation10 [shape = 'u8[16384]{0}', space=vmem, size = 0x4000, scoped, tag = 'input window, operand 4']
    #allocation11 [shape = 's32[2]{0}', space=sflag, size = 0x8, scoped, tag = 'scoped memory for tpu_custom_call.1']
    #allocation12 [shape = 'u8[2048]{0}', space=vmem, size = 0x800, scoped, tag = 'output window, operand 0']
    %14 = vsyncpa [#allocation5], 0
    %15 = vsyncpa [#allocation3], 0
    %s16 = scalar_lea.sflag [#allocation3], 1
    %17 = vsyncpa %s16, 0
    %18 = vsyncpa [#allocation8], 0
    %s19 = scalar_lea.sflag [#allocation8], 1
    %20 = vsyncpa %s19, 0
    %21 = vsyncpa [#allocation11], 0
    %s22 = scalar_lea.sflag [#allocation11], 1
    %23 = vsyncpa %s22, 0
    %24 = vsyncpa [#allocation4], 0
    %s25 = scalar_lea.sflag [#allocation4], 1
    %26 = vsyncpa %s25, 0
    loop: start=0, step=1, limit=4
    $region2: #{tpu_custom_call.1} parent=1 // loop_pre_header
      _
    $region3: #{tpu_custom_call.1} parent=1 // loop_header
      %s28 = sphi 0, %s32
      %p29 = scmp.ge.s32.totalorder %s28, 4
      %s35 = sphi 0, %s47
      %s36 = sphi 0, %s43
      %s37 = sphi 0, %s35
      %s38 = sphi 0, %s36
      %s39 = sphi 0, %s37
      %s40 = sphi 0, %s38
      %s48 = sphi 0, %s48
      %s50 = sphi 0, %s48
      %s51 = sphi 0, %s50
      %s65 = sphi 0, %s51
      %s73 = sphi 0, %s75
      %s76 = sphi 0, %s73
      %s77 = sphi 0, %s76
      %s93 = sphi 0, %s77
      %s101 = sphi 0, %s103
      %s104 = sphi 0, %s101
      %s105 = sphi 0, %s104
      %s121 = sphi 0, %s105
      %s129 = sphi 0, %s131
      %s132 = sphi 0, %s129
      %s133 = sphi 0, %s132
      %s149 = sphi 0, %s133
      %s157 = sphi 0, %s159
      %s160 = sphi 0, %s157
      %s161 = sphi 0, %s160
      %s177 = sphi 0, %s161
      %s181 = sphi 0, %s181
      %s183 = sphi 0, %s181
      %s184 = sphi 0, %s183
      %s198 = sphi 0, %s184
      %s202 = sphi 0, %s202
      %s204 = sphi 0, %s202
      %s205 = sphi 0, %s204
      %s219 = sphi 0, %s205
      %s223 = sphi 0, %s223
      %s225 = sphi 0, %s223
      %s226 = sphi 0, %s225
      %s240 = sphi 0, %s226
      %s244 = sphi 0, %s244
      %s246 = sphi 0, %s244
      %s247 = sphi 0, %s246
      %s261 = sphi 0, %s247
      %s269 = sphi 0, %s271
      %s272 = sphi 0, %s269
      %s273 = sphi 0, %s272
      %s289 = sphi 0, %s273
    $region4: #{tpu_custom_call.1} parent=1 // loop_header_branch
      %31 = sbr.rel (%p29) target = $region8
    $region5: #{tpu_custom_call.1} parent=1 // loop_body
      %s33 = ssub.s32 %s28, 1
      %s34 = ssub.s32 %s28, 2
      %s41 = sadd.s32 1, %s36
      %p42 = scmp.ge.s32.totalorder %s41, 2
      %s43 = scalar_select %p42, 0, %s41
      %s44 = sadd.s32 1, %s35
      %s45 = scalar_select %p42, %s44, %s35
      %p46 = scmp.ge.s32.totalorder %s45, 1
      %s47 = scalar_select %p46, 0, %s45
      %s49 = sadd.s32 %s48, 1
      %p52 = scmp.eq.s32.totalorder %s28, 1
      %p53 = scmp.ne.s32.totalorder %s48, %s50
      %p54 = scmp.eq.s32.totalorder %s28, 0
      %p55 = por %p53, %p54
      %p56 = scmp.ne.s32.totalorder %s48, %s50
      %p57 = scmp.eq.s32.totalorder %s33, 1
      %p58 = por %p56, %p57
      %p59 = scmp.ne.s32.totalorder %s50, %s51
      %p60 = scmp.eq.s32.totalorder %s33, 0
      %p61 = por %p59, %p60
      %p62 = scmp.ne.s32.totalorder %s50, %s51
      %p63 = scmp.eq.s32.totalorder %s34, 1
      %p64 = por %p62, %p63
      %p66 = scmp.ne.s32.totalorder %s51, %s65
      %p67 = scmp.eq.s32.totalorder %s34, 0
      %p68 = por %p66, %p67
      %s69 = ssub.s32 %s36, %s43
      %s70 = ssub.s32 %s35, %s47
      %s71 = sor.u32 %s69, %s70
      %p72 = scmp.eq.s32.totalorder %s71, 0
      %s74 = sadd.s32 %s73, 1
      %s75 = scalar_select %p72, %s73, %s74
      %p78 = pneg %p72
      %p79 = scmp.eq.s32.totalorder %s28, 1
      %p80 = por %p78, %p79
      %p81 = scmp.ne.s32.totalorder %s73, %s76
      %p82 = scmp.eq.s32.totalorder %s28, 0
      %p83 = por %p81, %p82
      %p84 = scmp.ne.s32.totalorder %s73, %s76
      %p85 = scmp.eq.s32.totalorder %s33, 1
      %p86 = por %p84, %p85
      %p87 = scmp.ne.s32.totalorder %s76, %s77
      %p88 = scmp.eq.s32.totalorder %s33, 0
      %p89 = por %p87, %p88
      %p90 = scmp.ne.s32.totalorder %s76, %s77
      %p91 = scmp.eq.s32.totalorder %s34, 1
      %p92 = por %p90, %p91
      %p94 = scmp.ne.s32.totalorder %s77, %s93
      %p95 = scmp.eq.s32.totalorder %s34, 0
      %p96 = por %p94, %p95
      %s97 = ssub.s32 %s36, %s43
      %s98 = ssub.s32 %s35, %s47
      %s99 = sor.u32 %s97, %s98
      %p100 = scmp.eq.s32.totalorder %s99, 0
      %s102 = sadd.s32 %s101, 1
      %s103 = scalar_select %p100, %s101, %s102
      %p106 = pneg %p100
      %p107 = scmp.eq.s32.totalorder %s28, 1
      %p108 = por %p106, %p107
      %p109 = scmp.ne.s32.totalorder %s101, %s104
      %p110 = scmp.eq.s32.totalorder %s28, 0
      %p111 = por %p109, %p110
      %p112 = scmp.ne.s32.totalorder %s101, %s104
      %p113 = scmp.eq.s32.totalorder %s33, 1
      %p114 = por %p112, %p113
      %p115 = scmp.ne.s32.totalorder %s104, %s105
      %p116 = scmp.eq.s32.totalorder %s33, 0
      %p117 = por %p115, %p116
      %p118 = scmp.ne.s32.totalorder %s104, %s105
      %p119 = scmp.eq.s32.totalorder %s34, 1
      %p120 = por %p118, %p119
      %p122 = scmp.ne.s32.totalorder %s105, %s121
      %p123 = scmp.eq.s32.totalorder %s34, 0
      %p124 = por %p122, %p123
      %s125 = ssub.s32 %s36, %s43
      %s126 = ssub.s32 %s35, %s47
      %s127 = sor.u32 %s125, %s126
      %p128 = scmp.eq.s32.totalorder %s127, 0
      %s130 = sadd.s32 %s129, 1
      %s131 = scalar_select %p128, %s129, %s130
      %p134 = pneg %p128
      %p135 = scmp.eq.s32.totalorder %s28, 1
      %p136 = por %p134, %p135
      %p137 = scmp.ne.s32.totalorder %s129, %s132
      %p138 = scmp.eq.s32.totalorder %s28, 0
      %p139 = por %p137, %p138
      %p140 = scmp.ne.s32.totalorder %s129, %s132
      %p141 = scmp.eq.s32.totalorder %s33, 1
      %p142 = por %p140, %p141
      %p143 = scmp.ne.s32.totalorder %s132, %s133
      %p144 = scmp.eq.s32.totalorder %s33, 0
      %p145 = por %p143, %p144
      %p146 = scmp.ne.s32.totalorder %s132, %s133
      %p147 = scmp.eq.s32.totalorder %s34, 1
      %p148 = por %p146, %p147
      %p150 = scmp.ne.s32.totalorder %s133, %s149
      %p151 = scmp.eq.s32.totalorder %s34, 0
      %p152 = por %p150, %p151
      %s153 = ssub.s32 %s36, %s43
      %s154 = ssub.s32 %s35, %s47
      %s155 = sor.u32 %s153, %s154
      %p156 = scmp.eq.s32.totalorder %s155, 0
      %s158 = sadd.s32 %s157, 1
      %s159 = scalar_select %p156, %s157, %s158
      %p162 = pneg %p156
      %p163 = scmp.eq.s32.totalorder %s28, 1
      %p164 = por %p162, %p163
      %p165 = scmp.ne.s32.totalorder %s157, %s160
      %p166 = scmp.eq.s32.totalorder %s28, 0
      %p167 = por %p165, %p166
      %p168 = scmp.ne.s32.totalorder %s157, %s160
      %p169 = scmp.eq.s32.totalorder %s33, 1
      %p170 = por %p168, %p169
      %p171 = scmp.ne.s32.totalorder %s160, %s161
      %p172 = scmp.eq.s32.totalorder %s33, 0
      %p173 = por %p171, %p172
      %p174 = scmp.ne.s32.totalorder %s160, %s161
      %p175 = scmp.eq.s32.totalorder %s34, 1
      %p176 = por %p174, %p175
      %p178 = scmp.ne.s32.totalorder %s161, %s177
      %p179 = scmp.eq.s32.totalorder %s34, 0
      %p180 = por %p178, %p179
      %s182 = sadd.s32 %s181, 1
      %p185 = scmp.eq.s32.totalorder %s28, 1
      %p186 = scmp.ne.s32.totalorder %s181, %s183
      %p187 = scmp.eq.s32.totalorder %s28, 0
      %p188 = por %p186, %p187
      %p189 = scmp.ne.s32.totalorder %s181, %s183
      %p190 = scmp.eq.s32.totalorder %s33, 1
      %p191 = por %p189, %p190
      %p192 = scmp.ne.s32.totalorder %s183, %s184
      %p193 = scmp.eq.s32.totalorder %s33, 0
      %p194 = por %p192, %p193
      %p195 = scmp.ne.s32.totalorder %s183, %s184
      %p196 = scmp.eq.s32.totalorder %s34, 1
      %p197 = por %p195, %p196
      %p199 = scmp.ne.s32.totalorder %s184, %s198
      %p200 = scmp.eq.s32.totalorder %s34, 0
      %p201 = por %p199, %p200
      %s203 = sadd.s32 %s202, 1
      %p206 = scmp.eq.s32.totalorder %s28, 1
      %p207 = scmp.ne.s32.totalorder %s202, %s204
      %p208 = scmp.eq.s32.totalorder %s28, 0
      %p209 = por %p207, %p208
      %p210 = scmp.ne.s32.totalorder %s202, %s204
      %p211 = scmp.eq.s32.totalorder %s33, 1
      %p212 = por %p210, %p211
      %p213 = scmp.ne.s32.totalorder %s204, %s205
      %p214 = scmp.eq.s32.totalorder %s33, 0
      %p215 = por %p213, %p214
      %p216 = scmp.ne.s32.totalorder %s204, %s205
      %p217 = scmp.eq.s32.totalorder %s34, 1
      %p218 = por %p216, %p217
      %p220 = scmp.ne.s32.totalorder %s205, %s219
      %p221 = scmp.eq.s32.totalorder %s34, 0
      %p222 = por %p220, %p221
      %s224 = sadd.s32 %s223, 1
      %p227 = scmp.eq.s32.totalorder %s28, 1
      %p228 = scmp.ne.s32.totalorder %s223, %s225
      %p229 = scmp.eq.s32.totalorder %s28, 0
      %p230 = por %p228, %p229
      %p231 = scmp.ne.s32.totalorder %s223, %s225
      %p232 = scmp.eq.s32.totalorder %s33, 1
      %p233 = por %p231, %p232
      %p234 = scmp.ne.s32.totalorder %s225, %s226
      %p235 = scmp.eq.s32.totalorder %s33, 0
      %p236 = por %p234, %p235
      %p237 = scmp.ne.s32.totalorder %s225, %s226
      %p238 = scmp.eq.s32.totalorder %s34, 1
      %p239 = por %p237, %p238
      %p241 = scmp.ne.s32.totalorder %s226, %s240
      %p242 = scmp.eq.s32.totalorder %s34, 0
      %p243 = por %p241, %p242
      %s245 = sadd.s32 %s244, 1
      %p248 = scmp.eq.s32.totalorder %s28, 1
      %p249 = scmp.ne.s32.totalorder %s244, %s246
      %p250 = scmp.eq.s32.totalorder %s28, 0
      %p251 = por %p249, %p250
      %p252 = scmp.ne.s32.totalorder %s244, %s246
      %p253 = scmp.eq.s32.totalorder %s33, 1
      %p254 = por %p252, %p253
      %p255 = scmp.ne.s32.totalorder %s246, %s247
      %p256 = scmp.eq.s32.totalorder %s33, 0
      %p257 = por %p255, %p256
      %p258 = scmp.ne.s32.totalorder %s246, %s247
      %p259 = scmp.eq.s32.totalorder %s34, 1
      %p260 = por %p258, %p259
      %p262 = scmp.ne.s32.totalorder %s247, %s261
      %p263 = scmp.eq.s32.totalorder %s34, 0
      %p264 = por %p262, %p263
      %s265 = ssub.s32 %s36, %s43
      %s266 = ssub.s32 %s35, %s47
      %s267 = sor.u32 %s265, %s266
      %p268 = scmp.eq.s32.totalorder %s267, 0
      %s270 = sadd.s32 %s269, 1
      %s271 = scalar_select %p268, %s269, %s270
      %p274 = pneg %p268
      %p275 = scmp.eq.s32.totalorder %s28, 1
      %p276 = por %p274, %p275
      %p277 = scmp.ne.s32.totalorder %s269, %s272
      %p278 = scmp.eq.s32.totalorder %s28, 0
      %p279 = por %p277, %p278
      %p280 = scmp.ne.s32.totalorder %s269, %s272
      %p281 = scmp.eq.s32.totalorder %s33, 1
      %p282 = por %p280, %p281
      %p283 = scmp.ne.s32.totalorder %s272, %s273
      %p284 = scmp.eq.s32.totalorder %s33, 0
      %p285 = por %p283, %p284
      %p286 = scmp.ne.s32.totalorder %s272, %s273
      %p287 = scmp.eq.s32.totalorder %s34, 1
      %p288 = por %p286, %p287
      %p290 = scmp.ne.s32.totalorder %s273, %s289
      %p291 = scmp.eq.s32.totalorder %s34, 0
      %p292 = por %p290, %p291
      %p293 = scmp.le.s32.totalorder 1, %s28
      %p294 = scmp.lt.s32.totalorder %s28, 3
      %p295 = pnand %p293, %p294
      %p296 = pneg %p295
      // Predicated region
      $region9: #{tpu_custom_call.1} parent=5 // pred_check
        _
      $region10: #{tpu_custom_call.1} parent=5 // pred_check_branch
        %298 = sbr.rel (%p295) target = $region12
      $region11: #{tpu_custom_call.1} parent=5 // pred_region
        %s299 = ssub.s32 %s28, 1
        // Predicated region
        $region13: #{tpu_custom_call.1} parent=11 // pred_check
          %p300 = pneg %p61
        $region14: #{tpu_custom_call.1} parent=11 // pred_check_branch
          %302 = sbr.rel (%p300) target = $region16
        $region15: #{tpu_custom_call.1} parent=11 // pred_region
          %s304 = ssub.s32 16, 16
          %305 = vsyncadd [#allocation5], %s304
          %308 = dma.hbm_to_smem %s0, 16, [#allocation2], [#allocation5]
        $region16: #{tpu_custom_call.1} parent=11 // pred_fallthru
          _
        // Predicated region
        $region17: #{tpu_custom_call.1} parent=11 // pred_check
          %p309 = pneg %p194
        $region18: #{tpu_custom_call.1} parent=11 // pred_check_branch
          %311 = sbr.rel (%p309) target = $region20
        $region19: #{tpu_custom_call.1} parent=11 // pred_region
          _
        $region20: #{tpu_custom_call.1} parent=11 // pred_fallthru
          _
        // Predicated region
        $region21: #{tpu_custom_call.1} parent=11 // pred_check
          %p312 = pneg %p215
        $region22: #{tpu_custom_call.1} parent=11 // pred_check_branch
          %314 = sbr.rel (%p312) target = $region24
        $region23: #{tpu_custom_call.1} parent=11 // pred_region
          _
        $region24: #{tpu_custom_call.1} parent=11 // pred_fallthru
          _
        // Predicated region
        $region25: #{tpu_custom_call.1} parent=11 // pred_check
          %p315 = pneg %p236
        $region26: #{tpu_custom_call.1} parent=11 // pred_check_branch
          %317 = sbr.rel (%p315) target = $region28
        $region27: #{tpu_custom_call.1} parent=11 // pred_region
          _
        $region28: #{tpu_custom_call.1} parent=11 // pred_fallthru
          _
        // Predicated region
        $region29: #{tpu_custom_call.1} parent=11 // pred_check
          %p318 = pneg %p257
        $region30: #{tpu_custom_call.1} parent=11 // pred_check_branch
          %320 = sbr.rel (%p318) target = $region32
        $region31: #{tpu_custom_call.1} parent=11 // pred_region
          _
        $region32: #{tpu_custom_call.1} parent=11 // pred_fallthru
          _
      $region12: #{tpu_custom_call.1} parent=5 // pred_fallthru
        _
      %p321 = scmp.lt.s32.totalorder %s28, 2
      // Predicated region
      $region33: #{tpu_custom_call.1} parent=5 // pred_check
        %p322 = pneg %p321
      $region34: #{tpu_custom_call.1} parent=5 // pred_check_branch
        %324 = sbr.rel (%p322) target = $region36
      $region35: #{tpu_custom_call.1} parent=5 // pred_region
        // Predicated region
        $region37: #{tpu_custom_call.1} parent=35 // pred_check
          %p325 = pneg %p83
        $region38: #{tpu_custom_call.1} parent=35 // pred_check_branch
          %327 = sbr.rel (%p325) target = $region40
        $region39: #{tpu_custom_call.1} parent=35 // pred_region
          %s328 = sand.u32 %s73, 1
          %s329 = scalar_lea.sflag [#allocation3], %s328
          %s330 = sand.u32 %s73, 1
          %s331 = smul.addr %s330, 16
          %s332 = scalar_lea.vmem [#allocation6], %s331
          %s333 = smul.u32 2, %s35
          %s335 = ssub.s32 256, 256
          %336 = vsyncadd %s329, %s335
          %s337 = smul.addr %s36, 2
          %s338 = sadd.s32 %s333, %s337
          %s339 = smul.addr %s338, 128
          %s340 = scalar_lea.hbm %s1, %s339
          %s342 = sshll.u32 %s332, 4
          %s343 = int_to_ptr.vmem [resolvable:$true] %s342
          %345 = dma.hbm_to_vmem [thread:$0]  %s340, 256, %s343, %s329
        $region40: #{tpu_custom_call.1} parent=35 // pred_fallthru
          _
        // Predicated region
        $region41: #{tpu_custom_call.1} parent=35 // pred_check
          %p346 = pneg %p111
        $region42: #{tpu_custom_call.1} parent=35 // pred_check_branch
          %348 = sbr.rel (%p346) target = $region44
        $region43: #{tpu_custom_call.1} parent=35 // pred_region
          %s349 = sand.u32 %s28, 1
          %s350 = scalar_lea.sflag [#allocation8], %s349
          %s351 = sand.u32 %s101, 1
          %s352 = smul.addr %s351, 16
          %s353 = scalar_lea.vmem [#allocation7], %s352
          %s354 = smul.u32 2, %s35
          %s356 = ssub.s32 256, 256
          %357 = vsyncadd %s350, %s356
          %s358 = smul.addr %s36, 2
          %s359 = sadd.s32 %s354, %s358
          %s360 = smul.addr %s359, 128
          %s361 = scalar_lea.hbm %s2, %s360
          %s363 = sshll.u32 %s353, 4
          %s364 = int_to_ptr.vmem [resolvable:$true] %s363
          %366 = dma.hbm_to_vmem [thread:$0]  %s361, 256, %s364, %s350
        $region44: #{tpu_custom_call.1} parent=35 // pred_fallthru
          _
        // Predicated region
        $region45: #{tpu_custom_call.1} parent=35 // pred_check
          %p367 = pneg %p139
        $region46: #{tpu_custom_call.1} parent=35 // pred_check_branch
          %369 = sbr.rel (%p367) target = $region48
        $region47: #{tpu_custom_call.1} parent=35 // pred_region
          %s370 = sand.u32 %s28, 1
          %s371 = scalar_lea.sflag [#allocation8], %s370
          %s372 = sand.u32 %s129, 1
          %s373 = smul.addr %s372, 16
          %s374 = scalar_lea.vmem [#allocation9], %s373
          %s375 = smul.u32 2, %s35
          %s377 = ssub.s32 256, 256
          %378 = vsyncadd %s371, %s377
          %s379 = smul.addr %s36, 2
          %s380 = sadd.s32 %s375, %s379
          %s381 = smul.addr %s380, 128
          %s382 = scalar_lea.hbm %s3, %s381
          %s384 = sshll.u32 %s374, 4
          %s385 = int_to_ptr.vmem [resolvable:$true] %s384
          %387 = dma.hbm_to_vmem [thread:$0]  %s382, 256, %s385, %s371
        $region48: #{tpu_custom_call.1} parent=35 // pred_fallthru
          _
        // Predicated region
        $region49: #{tpu_custom_call.1} parent=35 // pred_check
          %p388 = pneg %p167
        $region50: #{tpu_custom_call.1} parent=35 // pred_check_branch
          %390 = sbr.rel (%p388) target = $region52
        $region51: #{tpu_custom_call.1} parent=35 // pred_region
          %s391 = sand.u32 %s157, 1
          %s392 = scalar_lea.sflag [#allocation11], %s391
          %s393 = sand.u32 %s157, 1
          %s394 = smul.addr %s393, 16
          %s395 = scalar_lea.vmem [#allocation10], %s394
          %s396 = smul.u32 2, %s35
          %s398 = ssub.s32 256, 256
          %399 = vsyncadd %s392, %s398
          %s400 = smul.addr %s36, 2
          %s401 = sadd.s32 %s396, %s400
          %s402 = smul.addr %s401, 128
          %s403 = scalar_lea.hbm %s4, %s402
          %s405 = sshll.u32 %s395, 4
          %s406 = int_to_ptr.vmem [resolvable:$true] %s405
          %408 = dma.hbm_to_vmem [thread:$0]  %s403, 256, %s406, %s392
        $region52: #{tpu_custom_call.1} parent=35 // pred_fallthru
          _
      $region36: #{tpu_custom_call.1} parent=5 // pred_fallthru
        _
      %p409 = scmp.le.s32.totalorder 1, %s28
      %p410 = scmp.lt.s32.totalorder %s28, 3
      %p411 = pnand %p409, %p410
      %p412 = pneg %p411
      // Predicated region
      $region53: #{tpu_custom_call.1} parent=5 // pred_check
        _
      $region54: #{tpu_custom_call.1} parent=5 // pred_check_branch
        %414 = sbr.rel (%p411) target = $region56
      $region55: #{tpu_custom_call.1} parent=5 // pred_region
        %s415 = ssub.s32 %s28, 1
        // Predicated region
        $region57: #{tpu_custom_call.1} parent=55 // pred_check
          %p416 = pneg %p61
        $region58: #{tpu_custom_call.1} parent=55 // pred_check_branch
          %418 = sbr.rel (%p416) target = $region60
        $region59: #{tpu_custom_call.1} parent=55 // pred_region
          %419 = dma.done [#allocation5], 16
        $region60: #{tpu_custom_call.1} parent=55 // pred_fallthru
          _
        %s420 = sand.u32 %s76, 1
        %s421 = scalar_lea.sflag [#allocation3], %s420
        %s422 = sand.u32 %s76, 1
        %s423 = smul.addr %s422, 16
        %s424 = scalar_lea.vmem [#allocation6], %s423
        // Predicated region
        $region61: #{tpu_custom_call.1} parent=55 // pred_check
          %p425 = pneg %p89
        $region62: #{tpu_custom_call.1} parent=55 // pred_check_branch
          %427 = sbr.rel (%p425) target = $region64
        $region63: #{tpu_custom_call.1} parent=55 // pred_region
          %428 = dma.done %s421, 256
        $region64: #{tpu_custom_call.1} parent=55 // pred_fallthru
          _
        %s429 = sand.u32 %s33, 1
        %s430 = scalar_lea.sflag [#allocation8], %s429
        %s431 = sand.u32 %s104, 1
        %s432 = smul.addr %s431, 16
        %s433 = scalar_lea.vmem [#allocation7], %s432
        // Predicated region
        $region65: #{tpu_custom_call.1} parent=55 // pred_check
          %p434 = pneg %p117
        $region66: #{tpu_custom_call.1} parent=55 // pred_check_branch
          %436 = sbr.rel (%p434) target = $region68
        $region67: #{tpu_custom_call.1} parent=55 // pred_region
          %437 = dma.done %s430, 256
        $region68: #{tpu_custom_call.1} parent=55 // pred_fallthru
          _
        %s438 = sand.u32 %s33, 1
        %s439 = scalar_lea.sflag [#allocation8], %s438
        %s440 = sand.u32 %s132, 1
        %s441 = smul.addr %s440, 16
        %s442 = scalar_lea.vmem [#allocation9], %s441
        // Predicated region
        $region69: #{tpu_custom_call.1} parent=55 // pred_check
          %p443 = pneg %p145
        $region70: #{tpu_custom_call.1} parent=55 // pred_check_branch
          %445 = sbr.rel (%p443) target = $region72
        $region71: #{tpu_custom_call.1} parent=55 // pred_region
          %446 = dma.done %s439, 256
        $region72: #{tpu_custom_call.1} parent=55 // pred_fallthru
          _
        %s447 = sand.u32 %s160, 1
        %s448 = scalar_lea.sflag [#allocation11], %s447
        %s449 = sand.u32 %s160, 1
        %s450 = smul.addr %s449, 16
        %s451 = scalar_lea.vmem [#allocation10], %s450
        // Predicated region
        $region73: #{tpu_custom_call.1} parent=55 // pred_check
          %p452 = pneg %p173
        $region74: #{tpu_custom_call.1} parent=55 // pred_check_branch
          %454 = sbr.rel (%p452) target = $region76
        $region75: #{tpu_custom_call.1} parent=55 // pred_region
          %455 = dma.done %s448, 256
        $region76: #{tpu_custom_call.1} parent=55 // pred_fallthru
          _
        %456 = sfence
        %p457 = pneg %p61
        %p458 = pneg %p58
        %s459 = sand.u32 %s76, 1
        %s460 = scalar_lea.sflag [#allocation3], %s459
        %s461 = sand.u32 %s76, 1
        %s462 = smul.addr %s461, 16
        %s463 = scalar_lea.vmem [#allocation6], %s462
        %p464 = pneg %p89
        %p465 = pneg %p86
        %s466 = sand.u32 %s33, 1
        %s467 = scalar_lea.sflag [#allocation8], %s466
        %s468 = sand.u32 %s104, 1
        %s469 = smul.addr %s468, 16
        %s470 = scalar_lea.vmem [#allocation7], %s469
        %p471 = pneg %p117
        %p472 = pneg %p114
        %s473 = sand.u32 %s33, 1
        %s474 = scalar_lea.sflag [#allocation8], %s473
        %s475 = sand.u32 %s132, 1
        %s476 = smul.addr %s475, 16
        %s477 = scalar_lea.vmem [#allocation9], %s476
        %p478 = pneg %p145
        %p479 = pneg %p142
        %s480 = sand.u32 %s160, 1
        %s481 = scalar_lea.sflag [#allocation11], %s480
        %s482 = sand.u32 %s160, 1
        %s483 = smul.addr %s482, 16
        %s484 = scalar_lea.vmem [#allocation10], %s483
        %p485 = pneg %p173
        %p486 = pneg %p170
        %p487 = pneg %p194
        %p488 = pneg %p191
        %p489 = pneg %p215
        %p490 = pneg %p212
        %p491 = pneg %p236
        %p492 = pneg %p233
        %p493 = pneg %p257
        %p494 = pneg %p254
        %p495 = pneg %p285
        %p496 = pneg %p282
        %s497 = sand.u32 %s272, 1
        %s498 = scalar_lea.sflag [#allocation4], %s497
        %s499 = sand.u32 %s272, 1
        %s500 = smul.addr %s499, 2
        %s501 = scalar_lea.vmem [#allocation12], %s500
        %s502 = smul.u32 2, %s37
        %s503 = smul.u32 2, %s37
        %s504 = smul.u32 2, %s37
        %s505 = smul.u32 2, %s37
        %s506 = smul.u32 2, %s37
        %v507 = vld [vmem:[%s424] sm:$0xff]
        %v508 = vld [vmem:[%s424 + $0x8] sm:$0xff]
        %v509 = vld [vmem:[%s5] sm:$0x1]
        %v510 = vld [vmem:[%s433] sm:$0xff]
        %v511 = vld [vmem:[%s433 + $0x8] sm:$0xff]
        %v512 = vld [vmem:[%s6] sm:$0x1]
        %vm513 = vcmask 64512
        %v515 = vsel %vm513, %v512, 0
        %517 = vmatprep.subr.mxu0 %v511
        %518 = vmatpush1.msra.mxu0 %v510
        %519 = vmatprep.subr.mxu0 0.0
        %520 = vmatpush1.msra.mxu0 0.0
        %521 = vmatprep.subr.mxu0 0.0
        %522 = vmatpush1.msra.mxu0 0.0
        %523 = vmatprep.subr.mxu0 0.0
        %524 = vmatpush1.msra.mxu0 0.0
        %525 = vmatprep.subr.mxu0 0.0
        %526 = vmatpush1.msra.mxu0 0.0
        %527 = vmatprep.subr.mxu0 0.0
        %528 = vmatpush1.msra.mxu0 0.0
        %529 = vmatprep.subr.mxu0 0.0
        %530 = vmatpush1.msra.mxu0 0.0
        %531 = vmatprep.subr.mxu0 0.0
        %532 = vmatpush1.msra.mxu0 0.0
        %533 = vmatprep.subr.mxu0 0.0
        %534 = vmatpush1.msra.mxu0 0.0
        %535 = vmatprep.subr.mxu0 0.0
        %536 = vmatpush1.msra.mxu0 0.0
        %537 = vmatprep.subr.mxu0 0.0
        %538 = vmatpush1.msra.mxu0 0.0
        %539 = vmatprep.subr.mxu0 0.0
        %540 = vmatpush1.msra.mxu0 0.0
        %541 = vmatprep.subr.mxu0 0.0
        %542 = vmatpush1.msra.mxu0 0.0
        %543 = vmatprep.subr.mxu0 0.0
        %544 = vmatpush1.msra.mxu0 0.0
        %545 = vmatprep.subr.mxu0 0.0
        %546 = vmatpush1.msra.mxu0 0.0
        %547 = vmatprep.subr.mxu0 0.0
        %548 = vmatpush1.msra.mxu0 0.0
        %549 = vmatprep.subr.mxu0 0.0
        %550 = vmatpush1.msra.mxu0 0.0
        %551 = vmatprep.subr.mxu0 0.0
        %552 = vmatpush1.msra.mxu0 0.0
        %553 = vmatprep.subr.mxu0 0.0
        %554 = vmatpush1.msra.mxu0 0.0
        %555 = vmatprep.subr.mxu0 0.0
        %556 = vmatpush1.msra.mxu0 0.0
        %557 = vmatprep.subr.mxu0 0.0
        %558 = vmatpush1.msra.mxu0 0.0
        %559 = vmatprep.subr.mxu0 0.0
        %560 = vmatpush1.msra.mxu0 0.0
        %561 = vmatprep.subr.mxu0 0.0
        %562 = vmatpush1.msra.mxu0 0.0
        %563 = vmatprep.subr.mxu0 0.0
        %564 = vmatpush1.msra.mxu0 0.0
        %565 = vmatprep.subr.mxu0 0.0
        %566 = vmatpush1.msra.mxu0 0.0
        %567 = vmatprep.subr.mxu0 0.0
        %568 = vmatpush1.msra.mxu0 0.0
        %569 = vmatprep.subr.mxu0 0.0
        %570 = vmatpush1.msra.mxu0 0.0
        %571 = vmatprep.subr.mxu0 0.0
        %572 = vmatpush1.msra.mxu0 0.0
        %573 = vmatprep.subr.mxu0 0.0
        %574 = vmatpush1.msra.mxu0 0.0
        %575 = vmatprep.subr.mxu0 0.0
        %576 = vmatpush1.msra.mxu0 0.0
        %577 = vmatprep.subr.mxu0 0.0
        %578 = vmatpush1.msra.mxu0 0.0
        %579 = vmatprep.subr.mxu0 0.0
        %580 = vmatpush1.msra.mxu0 0.0
        %581 = vmatprep.mubr.f32.mxu0 0.0
        %582 = vmatmul.mubr.f32.gmra.mrb[0].mxu0 %v515
        %v583 = vpop.f32.mrb[0].mxu0
        %v584 = vadd.f32 0.0, %v583
        %v585 = vpop.f32.mrb[0].mxu0
        %v586 = vadd.f32 0.0, %v585
        %587 = vdwg.mxu0
        %v589 = vsel %vm513, %v509, 0
        %591 = vmatprep.subr.mxu0 %v508
        %592 = vmatpush1.msra.mxu0 %v507
        %593 = vmatprep.subr.mxu0 0.0
        %594 = vmatpush1.msra.mxu0 0.0
        %595 = vmatprep.subr.mxu0 0.0
        %596 = vmatpush1.msra.mxu0 0.0
        %597 = vmatprep.subr.mxu0 0.0
        %598 = vmatpush1.msra.mxu0 0.0
        %599 = vmatprep.subr.mxu0 0.0
        %600 = vmatpush1.msra.mxu0 0.0
        %601 = vmatprep.subr.mxu0 0.0
        %602 = vmatpush1.msra.mxu0 0.0
        %603 = vmatprep.subr.mxu0 0.0
        %604 = vmatpush1.msra.mxu0 0.0
        %605 = vmatprep.subr.mxu0 0.0
        %606 = vmatpush1.msra.mxu0 0.0
        %607 = vmatprep.subr.mxu0 0.0
        %608 = vmatpush1.msra.mxu0 0.0
        %609 = vmatprep.subr.mxu0 0.0
        %610 = vmatpush1.msra.mxu0 0.0
        %611 = vmatprep.subr.mxu0 0.0
        %612 = vmatpush1.msra.mxu0 0.0
        %613 = vmatprep.subr.mxu0 0.0
        %614 = vmatpush1.msra.mxu0 0.0
        %615 = vmatprep.subr.mxu0 0.0
        %616 = vmatpush1.msra.mxu0 0.0
        %617 = vmatprep.subr.mxu0 0.0
        %618 = vmatpush1.msra.mxu0 0.0
        %619 = vmatprep.subr.mxu0 0.0
        %620 = vmatpush1.msra.mxu0 0.0
        %621 = vmatprep.subr.mxu0 0.0
        %622 = vmatpush1.msra.mxu0 0.0
        %623 = vmatprep.subr.mxu0 0.0
        %624 = vmatpush1.msra.mxu0 0.0
        %625 = vmatprep.subr.mxu0 0.0
        %626 = vmatpush1.msra.mxu0 0.0
        %627 = vmatprep.subr.mxu0 0.0
        %628 = vmatpush1.msra.mxu0 0.0
        %629 = vmatprep.subr.mxu0 0.0
        %630 = vmatpush1.msra.mxu0 0.0
        %631 = vmatprep.subr.mxu0 0.0
        %632 = vmatpush1.msra.mxu0 0.0
        %633 = vmatprep.subr.mxu0 0.0
        %634 = vmatpush1.msra.mxu0 0.0
        %635 = vmatprep.subr.mxu0 0.0
        %636 = vmatpush1.msra.mxu0 0.0
        %637 = vmatprep.subr.mxu0 0.0
        %638 = vmatpush1.msra.mxu0 0.0
        %639 = vmatprep.subr.mxu0 0.0
        %640 = vmatpush1.msra.mxu0 0.0
        %641 = vmatprep.subr.mxu0 0.0
        %642 = vmatpush1.msra.mxu0 0.0
        %643 = vmatprep.subr.mxu0 0.0
        %644 = vmatpush1.msra.mxu0 0.0
        %645 = vmatprep.subr.mxu0 0.0
        %646 = vmatpush1.msra.mxu0 0.0
        %647 = vmatprep.subr.mxu0 0.0
        %648 = vmatpush1.msra.mxu0 0.0
        %649 = vmatprep.subr.mxu0 0.0
        %650 = vmatpush1.msra.mxu0 0.0
        %651 = vmatprep.subr.mxu0 0.0
        %652 = vmatpush1.msra.mxu0 0.0
        %653 = vmatprep.subr.mxu0 0.0
        %654 = vmatpush1.msra.mxu0 0.0
        %655 = vmatprep.mubr.f32.mxu0 0.0
        %656 = vmatmul.mubr.f32.gmra.mrb[0].mxu0 %v589
        %v657 = vpop.f32.mrb[0].mxu0
        %v658 = vadd.f32 %v584, %v657
        %v659 = vpop.f32.mrb[0].mxu0
        %v660 = vadd.f32 %v586, %v659
        %661 = vdwg.mxu0
        %v662 = vld [vmem:[%s442] sm:$0xff]
        %v663 = vld [vmem:[%s442 + $0x8] sm:$0xff]
        %v664 = vld [vmem:[%s7] sm:$0x1]
        %v666 = vsel %vm513, %v664, 0
        %668 = vmatprep.subr.mxu0 %v663
        %669 = vmatpush1.msra.mxu0 %v662
        %670 = vmatprep.subr.mxu0 0.0
        %671 = vmatpush1.msra.mxu0 0.0
        %672 = vmatprep.subr.mxu0 0.0
        %673 = vmatpush1.msra.mxu0 0.0
        %674 = vmatprep.subr.mxu0 0.0
        %675 = vmatpush1.msra.mxu0 0.0
        %676 = vmatprep.subr.mxu0 0.0
        %677 = vmatpush1.msra.mxu0 0.0
        %678 = vmatprep.subr.mxu0 0.0
        %679 = vmatpush1.msra.mxu0 0.0
        %680 = vmatprep.subr.mxu0 0.0
        %681 = vmatpush1.msra.mxu0 0.0
        %682 = vmatprep.subr.mxu0 0.0
        %683 = vmatpush1.msra.mxu0 0.0
        %684 = vmatprep.subr.mxu0 0.0
        %685 = vmatpush1.msra.mxu0 0.0
        %686 = vmatprep.subr.mxu0 0.0
        %687 = vmatpush1.msra.mxu0 0.0
        %688 = vmatprep.subr.mxu0 0.0
        %689 = vmatpush1.msra.mxu0 0.0
        %690 = vmatprep.subr.mxu0 0.0
        %691 = vmatpush1.msra.mxu0 0.0
        %692 = vmatprep.subr.mxu0 0.0
        %693 = vmatpush1.msra.mxu0 0.0
        %694 = vmatprep.subr.mxu0 0.0
        %695 = vmatpush1.msra.mxu0 0.0
        %696 = vmatprep.subr.mxu0 0.0
        %697 = vmatpush1.msra.mxu0 0.0
        %698 = vmatprep.subr.mxu0 0.0
        %699 = vmatpush1.msra.mxu0 0.0
        %700 = vmatprep.subr.mxu0 0.0
        %701 = vmatpush1.msra.mxu0 0.0
        %702 = vmatprep.subr.mxu0 0.0
        %703 = vmatpush1.msra.mxu0 0.0
        %704 = vmatprep.subr.mxu0 0.0
        %705 = vmatpush1.msra.mxu0 0.0
        %706 = vmatprep.subr.mxu0 0.0
        %707 = vmatpush1.msra.mxu0 0.0
        %708 = vmatprep.subr.mxu0 0.0
        %709 = vmatpush1.msra.mxu0 0.0
        %710 = vmatprep.subr.mxu0 0.0
        %711 = vmatpush1.msra.mxu0 0.0
        %712 = vmatprep.subr.mxu0 0.0
        %713 = vmatpush1.msra.mxu0 0.0
        %714 = vmatprep.subr.mxu0 0.0
        %715 = vmatpush1.msra.mxu0 0.0
        %716 = vmatprep.subr.mxu0 0.0
        %717 = vmatpush1.msra.mxu0 0.0
        %718 = vmatprep.subr.mxu0 0.0
        %719 = vmatpush1.msra.mxu0 0.0
        %720 = vmatprep.subr.mxu0 0.0
        %721 = vmatpush1.msra.mxu0 0.0
        %722 = vmatprep.subr.mxu0 0.0
        %723 = vmatpush1.msra.mxu0 0.0
        %724 = vmatprep.subr.mxu0 0.0
        %725 = vmatpush1.msra.mxu0 0.0
        %726 = vmatprep.subr.mxu0 0.0
        %727 = vmatpush1.msra.mxu0 0.0
        %728 = vmatprep.subr.mxu0 0.0
        %729 = vmatpush1.msra.mxu0 0.0
        %730 = vmatprep.subr.mxu0 0.0
        %731 = vmatpush1.msra.mxu0 0.0
        %732 = vmatprep.mubr.f32.mxu0 0.0
        %733 = vmatmul.mubr.f32.gmra.mrb[0].mxu0 %v666
        %v734 = vpop.f32.mrb[0].mxu0
        %v735 = vadd.f32 0.0, %v734
        %v736 = vpop.f32.mrb[0].mxu0
        %v737 = vadd.f32 0.0, %v736
        %738 = vdwg.mxu0
        %v739 = vadd.f32 %v658, %v735
        %v740 = vadd.f32 %v660, %v737
        %v741 = vld [vmem:[%s451] sm:$0xff]
        %v742 = vld [vmem:[%s451 + $0x8] sm:$0xff]
        %v743 = vld [vmem:[%s8] sm:$0x1]
        %v745 = vsel %vm513, %v743, 0
        %747 = vmatprep.subr.mxu0 %v742
        %748 = vmatpush1.msra.mxu0 %v741
        %749 = vmatprep.subr.mxu0 0.0
        %750 = vmatpush1.msra.mxu0 0.0
        %751 = vmatprep.subr.mxu0 0.0
        %752 = vmatpush1.msra.mxu0 0.0
        %753 = vmatprep.subr.mxu0 0.0
        %754 = vmatpush1.msra.mxu0 0.0
        %755 = vmatprep.subr.mxu0 0.0
        %756 = vmatpush1.msra.mxu0 0.0
        %757 = vmatprep.subr.mxu0 0.0
        %758 = vmatpush1.msra.mxu0 0.0
        %759 = vmatprep.subr.mxu0 0.0
        %760 = vmatpush1.msra.mxu0 0.0
        %761 = vmatprep.subr.mxu0 0.0
        %762 = vmatpush1.msra.mxu0 0.0
        %763 = vmatprep.subr.mxu0 0.0
        %764 = vmatpush1.msra.mxu0 0.0
        %765 = vmatprep.subr.mxu0 0.0
        %766 = vmatpush1.msra.mxu0 0.0
        %767 = vmatprep.subr.mxu0 0.0
        %768 = vmatpush1.msra.mxu0 0.0
        %769 = vmatprep.subr.mxu0 0.0
        %770 = vmatpush1.msra.mxu0 0.0
        %771 = vmatprep.subr.mxu0 0.0
        %772 = vmatpush1.msra.mxu0 0.0
        %773 = vmatprep.subr.mxu0 0.0
        %774 = vmatpush1.msra.mxu0 0.0
        %775 = vmatprep.subr.mxu0 0.0
        %776 = vmatpush1.msra.mxu0 0.0
        %777 = vmatprep.subr.mxu0 0.0
        %778 = vmatpush1.msra.mxu0 0.0
        %779 = vmatprep.subr.mxu0 0.0
        %780 = vmatpush1.msra.mxu0 0.0
        %781 = vmatprep.subr.mxu0 0.0
        %782 = vmatpush1.msra.mxu0 0.0
        %783 = vmatprep.subr.mxu0 0.0
        %784 = vmatpush1.msra.mxu0 0.0
        %785 = vmatprep.subr.mxu0 0.0
        %786 = vmatpush1.msra.mxu0 0.0
        %787 = vmatprep.subr.mxu0 0.0
        %788 = vmatpush1.msra.mxu0 0.0
        %789 = vmatprep.subr.mxu0 0.0
        %790 = vmatpush1.msra.mxu0 0.0
        %791 = vmatprep.subr.mxu0 0.0
        %792 = vmatpush1.msra.mxu0 0.0
        %793 = vmatprep.subr.mxu0 0.0
        %794 = vmatpush1.msra.mxu0 0.0
        %795 = vmatprep.subr.mxu0 0.0
        %796 = vmatpush1.msra.mxu0 0.0
        %797 = vmatprep.subr.mxu0 0.0
        %798 = vmatpush1.msra.mxu0 0.0
        %799 = vmatprep.subr.mxu0 0.0
        %800 = vmatpush1.msra.mxu0 0.0
        %801 = vmatprep.subr.mxu0 0.0
        %802 = vmatpush1.msra.mxu0 0.0
        %803 = vmatprep.subr.mxu0 0.0
        %804 = vmatpush1.msra.mxu0 0.0
        %805 = vmatprep.subr.mxu0 0.0
        %806 = vmatpush1.msra.mxu0 0.0
        %807 = vmatprep.subr.mxu0 0.0
        %808 = vmatpush1.msra.mxu0 0.0
        %809 = vmatprep.subr.mxu0 0.0
        %810 = vmatpush1.msra.mxu0 0.0
        %811 = vmatprep.mubr.f32.mxu0 0.0
        %812 = vmatmul.mubr.f32.gmra.mrb[0].mxu0 %v745
        %v813 = vpop.f32.mrb[0].mxu0
        %v814 = vadd.f32 0.0, %v813
        %v815 = vpop.f32.mrb[0].mxu0
        %v816 = vadd.f32 0.0, %v815
        %817 = vdwg.mxu0
        %v818 = vadd.f32 %v739, %v814
        %v819 = vadd.f32 %v740, %v816
        %s820 = sld [smem:[#allocation2 + %s38]]
        %v821 = vstv %s820
        %v822 = vadd.f32 %v818, %v821
        %v823 = vadd.f32 %v819, %v821
        %v824 = vmax.f32 %v822, 0.0
        %v825 = vmax.f32 %v823, 0.0
        %v826 = vadd.f32 %v824, 0.001
        %v827 = vadd.f32 %v825, 0.001
        %v830 = vcombine.low %v826, %v827
        %v832 = vunpack.c.l.s4 1966171168
        %v833 = vunpack.c.0.s8 %v832
        %v834 = vlaneseq
        %v835 = vshrl.u32 %v834, 7
        %v836 = vsub.s32 %v833, %v835
        %v837 = vrot.slane %v830, %v836
        %v839 = vunpack.c.l.s4 1966171168
        %v840 = vunpack.c.0.s8 %v839
        %v841 = vlaneseq
        %v842 = vshrl.u32 %v841, 7
        %v843 = vsub.s32 %v840, %v842
        %v844 = vrot.slane %v837, %v843
        %v846 = vlaneseq
        %vm847 = vcmp.ge.s32.totalorder %v846, 0
        %vm848 = vcmp.lt.s32.totalorder %v846, 256
        %vm849 = vmand %vm847, %vm848
        %850 = vst.msk [vmem:[%s501] sm:$0x3] %vm849, %v844
        %s851 = sand.u32 %s272, 1
        %s852 = scalar_lea.sflag [#allocation4], %s851
        %s853 = sand.u32 %s272, 1
        %s854 = smul.addr %s853, 2
        %s855 = scalar_lea.vmem [#allocation12], %s854
        // Predicated region
        $region77: #{tpu_custom_call.1} parent=55 // pred_check
          %p856 = pneg %p282
        $region78: #{tpu_custom_call.1} parent=55 // pred_check_branch
          %858 = sbr.rel (%p856) target = $region80
        $region79: #{tpu_custom_call.1} parent=55 // pred_region
          %s859 = smul.u32 2, %s37
          %s861 = ssub.s32 32, 32
          %862 = vsyncadd %s852, %s861
          %s863 = smul.addr %s38, 2
          %s864 = sadd.s32 %s859, %s863
          %s865 = smul.addr %s864, 16
          %s866 = scalar_lea.hbm %s9, %s865
          %s868 = sshll.u32 %s855, 4
          %s869 = int_to_ptr.vmem [resolvable:$true] %s868
          %871 = dma.vmem_to_hbm [thread:$0]  %s869, 32, %s866, %s852
        $region80: #{tpu_custom_call.1} parent=55 // pred_fallthru
          _
      $region56: #{tpu_custom_call.1} parent=5 // pred_fallthru
        _
      %p872 = scmp.le.s32.totalorder 2, %s28
      // Predicated region
      $region81: #{tpu_custom_call.1} parent=5 // pred_check
        %p873 = pneg %p872
      $region82: #{tpu_custom_call.1} parent=5 // pred_check_branch
        %875 = sbr.rel (%p873) target = $region84
      $region83: #{tpu_custom_call.1} parent=5 // pred_region
        %s876 = ssub.s32 %s28, 2
        // Predicated region
        $region85: #{tpu_custom_call.1} parent=83 // pred_check
          %p877 = pneg %p288
        $region86: #{tpu_custom_call.1} parent=83 // pred_check_branch
          %879 = sbr.rel (%p877) target = $region88
        $region87: #{tpu_custom_call.1} parent=83 // pred_region
          %s880 = sand.u32 %s273, 1
          %s881 = scalar_lea.sflag [#allocation4], %s880
          %s882 = sand.u32 %s273, 1
          %s883 = smul.addr %s882, 2
          %s884 = scalar_lea.vmem [#allocation12], %s883
          %885 = dma.done %s881, 32
        $region88: #{tpu_custom_call.1} parent=83 // pred_fallthru
          _
      $region84: #{tpu_custom_call.1} parent=5 // pred_fallthru
        _
    $region6: #{tpu_custom_call.1} parent=1 // loop_footer
      %s32 = sadd.s32 1, %s28
    $region7: #{tpu_custom_call.1} parent=1 // loop_footer_branch
      %27 = sbr.rel target = $region3
    $region8: #{tpu_custom_call.1} parent=1 // loop_exit
      _
    %886 = vsyncpa [#allocation3], 1
    %s887 = scalar_lea.sflag [#allocation3], 1
    %888 = vsyncpa %s887, 1
    %889 = vsyncpa [#allocation8], 1
    %s890 = scalar_lea.sflag [#allocation8], 1
    %891 = vsyncpa %s890, 1
    %892 = vsyncpa [#allocation11], 1
    %s893 = scalar_lea.sflag [#allocation11], 1
    %894 = vsyncpa %s893, 1
    %895 = vsyncpa [#allocation4], 1
    %s896 = scalar_lea.sflag [#allocation4], 1
    %897 = vsyncpa %s896, 1
    %898 = vsyncpa [#allocation5], 1
    %s899 = scalar_lea.sflag [#allocation5], 1
    %900 = vsyncpa %s899, 1

</llo_original>
